<compile_context>
chip_gen: v7x
topology: tpu7x:2x2x1
jax: 0.10.0
libtpu: 0.0.40
codegen_flags: <defaults>
</compile_context>

<pallas_src>
import jax
import jax.numpy as jnp
from jax.experimental import pallas as pl
from jax.experimental.pallas import tpu as pltpu

PAD = 128  # lane-dense padded width for all hidden / output activations


def _round_up(n, m):
    return ((n + m - 1) // m) * m


def mlp_kernel(x_ref, w1_ref, w2_ref, w3_ref, w4_ref, b_ref, o_ref):
    """One batch tile of the 4-layer MLP, fully in VMEM.

    x_ref : (TILE_M, D_in)   f32
    w*_ref: (·, 128)         bf16 (zero-padded to 128 output lanes)
    b_ref : (4, 128)         f32  (row l = bias of layer l, zero-padded)
    o_ref : (TILE_M, 128)    f32  (cols >= num_classes are zero)
    """
    x = x_ref[...].astype(jnp.bfloat16)

    # fc1 + relu
    h = jnp.dot(x, w1_ref[...], preferred_element_type=jnp.float32) + b_ref[0:1, :]
    h = jnp.maximum(h, 0.0)
    # fc2 + relu
    h = jnp.dot(h.astype(jnp.bfloat16), w2_ref[...],
                preferred_element_type=jnp.float32) + b_ref[1:2, :]
    h = jnp.maximum(h, 0.0)
    # fc3 + relu
    h = jnp.dot(h.astype(jnp.bfloat16), w3_ref[...],
                preferred_element_type=jnp.float32) + b_ref[2:3, :]
    h = jnp.maximum(h, 0.0)
    # fc4 (no activation)
    h = jnp.dot(h.astype(jnp.bfloat16), w4_ref[...],
                preferred_element_type=jnp.float32) + b_ref[3:4, :]

    o_ref[...] = h


def _pad2d(a, rows, cols):
    return jnp.pad(a, ((0, rows - a.shape[0]), (0, cols - a.shape[1])))


def mlp_forward(x, params, *, tile_m=256):
    """params = (w1, b1, w2, b2, w3, b3, w4, b4); weights stored [in, out] (torch W.T)."""
    w1, b1, w2, b2, w3, b3, w4, b4 = params
    batch, d_in = x.shape
    num_classes = w4.shape[1]

    # --- pack / pad parameters once (lane-dense, bf16 matmul inputs) ----------
    w1p = _pad2d(w1, d_in, PAD).astype(jnp.bfloat16)   # (d_in, 128)
    w2p = _pad2d(w2, PAD, PAD).astype(jnp.bfloat16)    # (128, 128)
    w3p = _pad2d(w3, PAD, PAD).astype(jnp.bfloat16)    # (128, 128)
    w4p = _pad2d(w4, PAD, PAD).astype(jnp.bfloat16)    # (128, 128)
    biases = jnp.stack([
        _pad2d(b1, 1, PAD)[0], _pad2d(b2, 1, PAD)[0],
        _pad2d(b3, 1, PAD)[0], _pad2d(b4, 1, PAD)[0],
    ]).astype(jnp.float32)                              # (4, 128)

    # --- batch tiling ----------------------------------------------------------
    tile_m = min(tile_m, _round_up(batch, 8))           # small batches: one tile
    padded_batch = _round_up(batch, tile_m)
    if padded_batch != batch:
        x = jnp.pad(x, ((0, padded_batch - batch), (0, 0)))
    grid = (padded_batch // tile_m,)

    resident = lambda i: (0, 0)                          # weights stay put in VMEM
    flops = 2 * padded_batch * (d_in * PAD + 3 * PAD * PAD)
    bytes_accessed = (
        padded_batch * d_in * 4                          # x (f32 in)
        + padded_batch * PAD * 4                         # out (f32)
        + (w1p.size + w2p.size + w3p.size + w4p.size) * 2
        + biases.size * 4
    )

    out = pl.pallas_call(
        mlp_kernel,
        out_shape=jax.ShapeDtypeStruct((padded_batch, PAD), jnp.float32),
        grid=grid,
        in_specs=[
            pl.BlockSpec((tile_m, d_in), lambda i: (i, 0)),   # streamed x tiles
            pl.BlockSpec((d_in, PAD), resident),
            pl.BlockSpec((PAD, PAD), resident),
            pl.BlockSpec((PAD, PAD), resident),
            pl.BlockSpec((PAD, PAD), resident),
            pl.BlockSpec((4, PAD), resident),
        ],
        out_specs=pl.BlockSpec((tile_m, PAD), lambda i: (i, 0)),
        compiler_params=pltpu.CompilerParams(
            dimension_semantics=("parallel",)),              # v7x: 2 TCs share grid
        cost_estimate=pl.CostEstimate(
            flops=flops, transcendentals=0, bytes_accessed=bytes_accessed),
    )(x, w1p, w2p, w3p, w4p, biases)

    return out[:batch, :num_classes]


def init_params(key, input_dim, num_classes):
    """Deterministic init mimicking torch.nn.Linear (uniform +/- 1/sqrt(fan_in))."""
    dims = [(input_dim, 128), (128, 64), (64, 32), (32, num_classes)]
    params = []
    for fin, fout in dims:
        kw, kb, key = jax.random.split(key, 3)
        bound = 1.0 / jnp.sqrt(fin)
        w = jax.random.uniform(kw, (fin, fout), jnp.float32, -bound, bound)  # [in, out]
        b = jax.random.uniform(kb, (1, fout), jnp.float32, -bound, bound)
        params.extend([w, b])
    return tuple(params)


def mlp_reference(x, params):
    """Plain-JAX f32 reference for correctness check."""
    w1, b1, w2, b2, w3, b3, w4, b4 = params
    h = jnp.maximum(x @ w1 + b1, 0.0)
    h = jnp.maximum(h @ w2 + b2, 0.0)
    h = jnp.maximum(h @ w3 + b3, 0.0)
    return h @ w4 + b4


if __name__ == "__main__":
    key = jax.random.PRNGKey(0)
    kx, kp, kx2 = jax.random.split(key, 3)

    input_dim, num_classes = 32, 10
    params = init_params(kp, input_dim, num_classes)

    # Small-batch check (single tile).
    batch = 8
    x = jax.random.normal(kx, (batch, input_dim), jnp.float32)
    out = jax.block_until_ready(mlp_forward(x, params))
    ref = mlp_reference(x, params)
    assert out.shape == (batch, num_classes)
    # bf16 matmul inputs with f32 accumulation -> loosened tolerance.
    assert jnp.allclose(out, ref, atol=5e-2, rtol=5e-2)

    # Gridded multi-tile check (exercises the batch pipeline / resident weights).
    batch2 = 512
    x2 = jax.random.normal(kx2, (batch2, input_dim), jnp.float32)
    out2 = jax.block_until_ready(mlp_forward(x2, params))
    ref2 = mlp_reference(x2, params)
    assert out2.shape == (batch2, num_classes)
    assert jnp.allclose(out2, ref2, atol=5e-2, rtol=5e-2)

    print("KERNEL_OK")
</pallas_src>

<mosaic_0001>
module attributes {stable_mosaic.version = 11 : i64} {
  func.func @mlp_kernel(%arg0: i32, %arg1: memref<8x32xf32, #tpu.memory_space<vmem>>, %arg2: memref<32x128xbf16, #tpu.memory_space<vmem>>, %arg3: memref<128x128xbf16, #tpu.memory_space<vmem>>, %arg4: memref<128x128xbf16, #tpu.memory_space<vmem>>, %arg5: memref<128x128xbf16, #tpu.memory_space<vmem>>, %arg6: memref<4x128xf32, #tpu.memory_space<vmem>>, %arg7: memref<8x128xf32, #tpu.memory_space<vmem>>) attributes {dimension_semantics = [#tpu.dimension_semantics<parallel>], iteration_bounds = array<i64: 1>, scalar_prefetch = 0 : i64, scratch_operands = 0 : i64, tpu.core_type = #tpu.core_type<tc>, window_params = [{transform_indices = @transform_0, window_bounds = array<i64: 8, 32>}, {pipeline_mode = #tpu.pipeline_mode<synchronous>, transform_indices = @transform_1, window_bounds = array<i64: 32, 128>}, {pipeline_mode = #tpu.pipeline_mode<synchronous>, transform_indices = @transform_2, window_bounds = array<i64: 128, 128>}, {pipeline_mode = #tpu.pipeline_mode<synchronous>, transform_indices = @transform_3, window_bounds = array<i64: 128, 128>}, {pipeline_mode = #tpu.pipeline_mode<synchronous>, transform_indices = @transform_4, window_bounds = array<i64: 128, 128>}, {pipeline_mode = #tpu.pipeline_mode<synchronous>, transform_indices = @transform_5, window_bounds = array<i64: 4, 128>}, {transform_indices = @transform_6, window_bounds = array<i64: 8, 128>}]} {
    %c0 = arith.constant 0 : index
    %c0_0 = arith.constant 0 : index
    %0 = vector.load %arg1[%c0, %c0_0] : memref<8x32xf32, #tpu.memory_space<vmem>>, vector<8x32xf32>
    %1 = arith.truncf %0 : vector<8x32xf32> to vector<8x32xbf16>
    %c0_1 = arith.constant 0 : index
    %c0_2 = arith.constant 0 : index
    %2 = vector.load %arg2[%c0_1, %c0_2] : memref<32x128xbf16, #tpu.memory_space<vmem>>, vector<32x128xbf16>
    %cst = arith.constant dense<0.000000e+00> : vector<8x128xf32>
    %3 = tpu.matmul %1, %2, %cst {dimension_numbers = #tpu.dot_dimension_numbers<[1], [0], [0], [1], [0, 0, 1, 1], [], []>} : vector<8x32xbf16>, vector<32x128xbf16>, vector<8x128xf32> -> vector<8x128xf32>
    %c0_3 = arith.constant 0 : index
    %c0_4 = arith.constant 0 : index
    %4 = vector.load %arg6[%c0_3, %c0_4] : memref<4x128xf32, #tpu.memory_space<vmem>>, vector<1x128xf32>
    %5 = vector.broadcast %4 : vector<1x128xf32> to vector<8x128xf32>
    %6 = arith.addf %3, %5 : vector<8x128xf32>
    %cst_5 = arith.constant 0.000000e+00 : f32
    %7 = vector.broadcast %cst_5 : f32 to vector<8x128xf32>
    %8 = arith.maximumf %6, %7 : vector<8x128xf32>
    %9 = arith.truncf %8 : vector<8x128xf32> to vector<8x128xbf16>
    %c0_6 = arith.constant 0 : index
    %c0_7 = arith.constant 0 : index
    %10 = vector.load %arg3[%c0_6, %c0_7] : memref<128x128xbf16, #tpu.memory_space<vmem>>, vector<128x128xbf16>
    %cst_8 = arith.constant dense<0.000000e+00> : vector<8x128xf32>
    %11 = tpu.matmul %9, %10, %cst_8 {dimension_numbers = #tpu.dot_dimension_numbers<[1], [0], [0], [1], [0, 0, 1, 1], [], []>} : vector<8x128xbf16>, vector<128x128xbf16>, vector<8x128xf32> -> vector<8x128xf32>
    %c1 = arith.constant 1 : index
    %c0_9 = arith.constant 0 : index
    %12 = vector.load %arg6[%c1, %c0_9] : memref<4x128xf32, #tpu.memory_space<vmem>>, vector<1x128xf32>
    %13 = vector.broadcast %12 : vector<1x128xf32> to vector<8x128xf32>
    %14 = arith.addf %11, %13 : vector<8x128xf32>
    %cst_10 = arith.constant 0.000000e+00 : f32
    %15 = vector.broadcast %cst_10 : f32 to vector<8x128xf32>
    %16 = arith.maximumf %14, %15 : vector<8x128xf32>
    %17 = arith.truncf %16 : vector<8x128xf32> to vector<8x128xbf16>
    %c0_11 = arith.constant 0 : index
    %c0_12 = arith.constant 0 : index
    %18 = vector.load %arg4[%c0_11, %c0_12] : memref<128x128xbf16, #tpu.memory_space<vmem>>, vector<128x128xbf16>
    %cst_13 = arith.constant dense<0.000000e+00> : vector<8x128xf32>
    %19 = tpu.matmul %17, %18, %cst_13 {dimension_numbers = #tpu.dot_dimension_numbers<[1], [0], [0], [1], [0, 0, 1, 1], [], []>} : vector<8x128xbf16>, vector<128x128xbf16>, vector<8x128xf32> -> vector<8x128xf32>
    %c2 = arith.constant 2 : index
    %c0_14 = arith.constant 0 : index
    %20 = vector.load %arg6[%c2, %c0_14] : memref<4x128xf32, #tpu.memory_space<vmem>>, vector<1x128xf32>
    %21 = vector.broadcast %20 : vector<1x128xf32> to vector<8x128xf32>
    %22 = arith.addf %19, %21 : vector<8x128xf32>
    %cst_15 = arith.constant 0.000000e+00 : f32
    %23 = vector.broadcast %cst_15 : f32 to vector<8x128xf32>
    %24 = arith.maximumf %22, %23 : vector<8x128xf32>
    %25 = arith.truncf %24 : vector<8x128xf32> to vector<8x128xbf16>
    %c0_16 = arith.constant 0 : index
    %c0_17 = arith.constant 0 : index
    %26 = vector.load %arg5[%c0_16, %c0_17] : memref<128x128xbf16, #tpu.memory_space<vmem>>, vector<128x128xbf16>
    %cst_18 = arith.constant dense<0.000000e+00> : vector<8x128xf32>
    %27 = tpu.matmul %25, %26, %cst_18 {dimension_numbers = #tpu.dot_dimension_numbers<[1], [0], [0], [1], [0, 0, 1, 1], [], []>} : vector<8x128xbf16>, vector<128x128xbf16>, vector<8x128xf32> -> vector<8x128xf32>
    %c3 = arith.constant 3 : index
    %c0_19 = arith.constant 0 : index
    %28 = vector.load %arg6[%c3, %c0_19] : memref<4x128xf32, #tpu.memory_space<vmem>>, vector<1x128xf32>
    %29 = vector.broadcast %28 : vector<1x128xf32> to vector<8x128xf32>
    %30 = arith.addf %27, %29 : vector<8x128xf32>
    %c0_20 = arith.constant 0 : index
    %c0_21 = arith.constant 0 : index
    %31 = vector.load %arg7[%c0_20, %c0_21] : memref<8x128xf32, #tpu.memory_space<vmem>>, vector<8x128xf32>
    tpu.vector_store %arg7[%c0_20, %c0_21], %30 {strides = array<i32>} : memref<8x128xf32, #tpu.memory_space<vmem>>, vector<8x128xf32>,
    return
  }
  func.func @transform_0(%arg0: i32) -> (i32, i32) {
    %c0_i32 = arith.constant 0 : i32
    %c0_i32_0 = arith.constant 0 : i32
    return %arg0, %c0_i32 : i32, i32
  }
  func.func @transform_1(%arg0: i32) -> (i32, i32) {
    %c0_i32 = arith.constant 0 : i32
    %c0_i32_0 = arith.constant 0 : i32
    %c0_i32_1 = arith.constant 0 : i32
    return %c0_i32, %c0_i32_0 : i32, i32
  }
  func.func @transform_2(%arg0: i32) -> (i32, i32) {
    %c0_i32 = arith.constant 0 : i32
    %c0_i32_0 = arith.constant 0 : i32
    %c0_i32_1 = arith.constant 0 : i32
    return %c0_i32, %c0_i32_0 : i32, i32
  }
  func.func @transform_3(%arg0: i32) -> (i32, i32) {
    %c0_i32 = arith.constant 0 : i32
    %c0_i32_0 = arith.constant 0 : i32
    %c0_i32_1 = arith.constant 0 : i32
    return %c0_i32, %c0_i32_0 : i32, i32
  }
  func.func @transform_4(%arg0: i32) -> (i32, i32) {
    %c0_i32 = arith.constant 0 : i32
    %c0_i32_0 = arith.constant 0 : i32
    %c0_i32_1 = arith.constant 0 : i32
    return %c0_i32, %c0_i32_0 : i32, i32
  }
  func.func @transform_5(%arg0: i32) -> (i32, i32) {
    %c0_i32 = arith.constant 0 : i32
    %c0_i32_0 = arith.constant 0 : i32
    %c0_i32_1 = arith.constant 0 : i32
    return %c0_i32, %c0_i32_0 : i32, i32
  }
  func.func @transform_6(%arg0: i32) -> (i32, i32) {
    %c0_i32 = arith.constant 0 : i32
    %c0_i32_0 = arith.constant 0 : i32
    return %arg0, %c0_i32 : i32, i32
  }
}

</mosaic_0001>

<llo_original>
// kernel: tpu_custom_call.1
$region0: #{tpu_custom_call.1}
  #allocation0 [shape = 'u32[]', space=smem, size = 0x4, offset = 0x4, fixed_abs, tag = 'smem constant byte address 0x4 - core index']
  #allocation1 [shape = 'u32[144,128]{1,0:T(1,128)}', space=vmem, size = 0x12000, scoped, tag = 'internal scratch']
  %s0 = inlined_call_operand.hbm [shape: f32[8,32], index: 0, kind: input, shape index: {}]
  %s1 = inlined_call_operand.hbm [shape: bf16[32,128], index: 1, kind: input, shape index: {}]
  %s2 = inlined_call_operand.hbm [shape: bf16[128,128], index: 2, kind: input, shape index: {}]
  %s3 = inlined_call_operand.hbm [shape: bf16[128,128], index: 3, kind: input, shape index: {}]
  %s4 = inlined_call_operand.hbm [shape: bf16[128,128], index: 4, kind: input, shape index: {}]
  %s5 = inlined_call_operand.vmem [shape: f32[4,128], index: 5, kind: input, shape index: {}]
  %s6 = inlined_call_operand.hbm [shape: f32[8,128], index: 6, kind: output, shape index: {}]
  %s7 = sld [smem:[#allocation0]]
  $region54: #{tpu_custom_call.1} parent=0
    _
  %s9 = ssub.s32 1, %s7
  %s10 = scalar_select 0, %s9, %s7
  $region1: #{tpu_custom_call.1} parent=0
    #allocation2 [shape = 'u8[4096]{0}', space=vmem, size = 0x1000, scoped, tag = 'input window, operand 0, single buffered']
    #allocation3 [shape = 's32[1]{0}', space=sflag, size = 0x4, scoped, tag = 'scoped memory for tpu_custom_call.1']
    #allocation4 [shape = 's32[1]{0}', space=sflag, size = 0x4, scoped, tag = 'scoped memory for tpu_custom_call.1']
    #allocation5 [shape = 'u8[8192]{0}', space=vmem, size = 0x2000, scoped, tag = 'input window, operand 1, single buffered']
    #allocation6 [shape = 's32[1]{0}', space=sflag, size = 0x4, scoped, tag = 'scoped memory for tpu_custom_call.1']
    #allocation7 [shape = 'u8[32768]{0}', space=vmem, size = 0x8000, scoped, tag = 'input window, operand 2, single buffered']
    #allocation8 [shape = 'u8[32768]{0}', space=vmem, size = 0x8000, scoped, tag = 'input window, operand 3, single buffered']
    #allocation9 [shape = 's32[1]{0}', space=sflag, size = 0x4, scoped, tag = 'scoped memory for tpu_custom_call.1']
    #allocation10 [shape = 'u8[32768]{0}', space=vmem, size = 0x8000, scoped, tag = 'input window, operand 4, single buffered']
    #allocation11 [shape = 'u8[4096]{0}', space=vmem, size = 0x1000, scoped, tag = 'output window, operand 0, single buffered']
    %11 = vsyncpa [#allocation3], 0
    %12 = vsyncpa [#allocation6], 0
    %13 = vsyncpa [#allocation9], 0
    %14 = vsyncpa [#allocation4], 0
    // Predicated region
    $region2: #{tpu_custom_call.1} parent=1 // pred_check
      _
    $region3: #{tpu_custom_call.1} parent=1 // pred_check_branch
      %16 = sbr.rel (0) target = $region5
    $region4: #{tpu_custom_call.1} parent=1 // pred_region
      %s18 = ssub.s32 128, 128
      %19 = vsyncadd [#allocation3], %s18
      %s21 = sshll.u32 [#allocation2], 4
      %s22 = int_to_ptr.vmem [resolvable:$true] %s21
      %24 = dma.hbm_to_vmem [thread:$0]  %s0, 128, %s22, [#allocation3]
    $region5: #{tpu_custom_call.1} parent=1 // pred_fallthru
      _
    // Predicated region
    $region6: #{tpu_custom_call.1} parent=1 // pred_check
      _
    $region7: #{tpu_custom_call.1} parent=1 // pred_check_branch
      %26 = sbr.rel (0) target = $region9
    $region8: #{tpu_custom_call.1} parent=1 // pred_region
      %s28 = ssub.s32 256, 256
      %29 = vsyncadd [#allocation6], %s28
      %s30 = sshll.u32 [#allocation5], 4
      %s31 = int_to_ptr.vmem [resolvable:$true] %s30
      %36 = dma.hbm_to_vmem [thread:$0]  %s1, 256, %s31, [#allocation6], 64, 64, 4
    $region9: #{tpu_custom_call.1} parent=1 // pred_fallthru
      _
    // Predicated region
    $region10: #{tpu_custom_call.1} parent=1 // pred_check
      _
    $region11: #{tpu_custom_call.1} parent=1 // pred_check_branch
      %38 = sbr.rel (0) target = $region13
    $region12: #{tpu_custom_call.1} parent=1 // pred_region
      %s40 = ssub.s32 1024, 1024
      %41 = vsyncadd [#allocation6], %s40
      %s42 = sshll.u32 [#allocation7], 4
      %s43 = int_to_ptr.vmem [resolvable:$true] %s42
      %48 = dma.hbm_to_vmem [thread:$0]  %s2, 1024, %s43, [#allocation6], 64, 64, 4
    $region13: #{tpu_custom_call.1} parent=1 // pred_fallthru
      _
    // Predicated region
    $region14: #{tpu_custom_call.1} parent=1 // pred_check
      _
    $region15: #{tpu_custom_call.1} parent=1 // pred_check_branch
      %50 = sbr.rel (0) target = $region17
    $region16: #{tpu_custom_call.1} parent=1 // pred_region
      %s52 = ssub.s32 1024, 1024
      %53 = vsyncadd [#allocation9], %s52
      %s54 = sshll.u32 [#allocation8], 4
      %s55 = int_to_ptr.vmem [resolvable:$true] %s54
      %60 = dma.hbm_to_vmem [thread:$0]  %s3, 1024, %s55, [#allocation9], 64, 64, 4
    $region17: #{tpu_custom_call.1} parent=1 // pred_fallthru
      _
    // Predicated region
    $region18: #{tpu_custom_call.1} parent=1 // pred_check
      _
    $region19: #{tpu_custom_call.1} parent=1 // pred_check_branch
      %62 = sbr.rel (0) target = $region21
    $region20: #{tpu_custom_call.1} parent=1 // pred_region
      %s64 = ssub.s32 1024, 1024
      %65 = vsyncadd [#allocation9], %s64
      %s66 = sshll.u32 [#allocation10], 4
      %s67 = int_to_ptr.vmem [resolvable:$true] %s66
      %72 = dma.hbm_to_vmem [thread:$0]  %s4, 1024, %s67, [#allocation9], 64, 64, 4
    $region21: #{tpu_custom_call.1} parent=1 // pred_fallthru
      _
    // Predicated region
    $region22: #{tpu_custom_call.1} parent=1 // pred_check
      _
    $region23: #{tpu_custom_call.1} parent=1 // pred_check_branch
      %74 = sbr.rel (0) target = $region25
    $region24: #{tpu_custom_call.1} parent=1 // pred_region
      _
    $region25: #{tpu_custom_call.1} parent=1 // pred_fallthru
      _
    // Predicated region
    $region26: #{tpu_custom_call.1} parent=1 // pred_check
      _
    $region27: #{tpu_custom_call.1} parent=1 // pred_check_branch
      %76 = sbr.rel (0) target = $region29
    $region28: #{tpu_custom_call.1} parent=1 // pred_region
      %77 = dma.done [#allocation3], 128
    $region29: #{tpu_custom_call.1} parent=1 // pred_fallthru
      _
    // Predicated region
    $region30: #{tpu_custom_call.1} parent=1 // pred_check
      _
    $region31: #{tpu_custom_call.1} parent=1 // pred_check_branch
      %79 = sbr.rel (0) target = $region33
    $region32: #{tpu_custom_call.1} parent=1 // pred_region
      %80 = dma.done [#allocation6], 256
    $region33: #{tpu_custom_call.1} parent=1 // pred_fallthru
      _
    // Predicated region
    $region34: #{tpu_custom_call.1} parent=1 // pred_check
      _
    $region35: #{tpu_custom_call.1} parent=1 // pred_check_branch
      %82 = sbr.rel (0) target = $region37
    $region36: #{tpu_custom_call.1} parent=1 // pred_region
      %83 = dma.done [#allocation6], 1024
    $region37: #{tpu_custom_call.1} parent=1 // pred_fallthru
      _
    // Predicated region
    $region38: #{tpu_custom_call.1} parent=1 // pred_check
      _
    $region39: #{tpu_custom_call.1} parent=1 // pred_check_branch
      %85 = sbr.rel (0) target = $region41
    $region40: #{tpu_custom_call.1} parent=1 // pred_region
      %86 = dma.done [#allocation9], 1024
    $region41: #{tpu_custom_call.1} parent=1 // pred_fallthru
      _
    // Predicated region
    $region42: #{tpu_custom_call.1} parent=1 // pred_check
      _
    $region43: #{tpu_custom_call.1} parent=1 // pred_check_branch
      %88 = sbr.rel (0) target = $region45
    $region44: #{tpu_custom_call.1} parent=1 // pred_region
      %89 = dma.done [#allocation9], 1024
    $region45: #{tpu_custom_call.1} parent=1 // pred_fallthru
      _
    %v91 = vld [vmem:[#allocation2] sm:$0xff]
    %v92 = vpack.c.bf16 %v91, %v91
    %v93 = vld [vmem:[#allocation5] sm:$0xf]
    %v94 = vld [vmem:[#allocation5 + $0x4] sm:$0xf]
    %v95 = vld [vmem:[#allocation5 + $0x8] sm:$0xf]
    %v96 = vld [vmem:[#allocation5 + $0xc] sm:$0xf]
    %v97 = vld [vmem:[%s5] sm:$0x1]
    %v98 = vlaneseq
    %v99 = vshrl.u32 %v98, 7
    %v100 = vsub.s32 0, %v99
    %v101 = vrot.slane %v97, %v100
    %v106 = vunpack.c.l.b16 %v93
    %v107 = vunpack.c.l.b16 %v94
    %v108 = vunpack.c.l.b16 %v95
    %v109 = vunpack.c.l.b16 %v96
    %v110 = vpack.c.b16 %v107, %v106
    %v111 = vpack.c.b16 %v109, %v108
    %vm114 = vcmask 261120
    %v116 = vsel %vm114, %v92, 0
    %118 = vmatprep.subr.bf16.mxu0 0
    %119 = vmatpush1.bf16.msra.mxu0 %v110
    %120 = vmatprep.subr.bf16.mxu0 0
    %121 = vmatpush1.bf16.msra.mxu0 %v111
    %122 = vmatprep.subr.bf16.mxu0 0
    %123 = vmatpush1.bf16.msra.mxu0 0
    %124 = vmatprep.subr.bf16.mxu0 0
    %125 = vmatpush1.bf16.msra.mxu0 0
    %126 = vmatprep.subr.bf16.mxu0 0
    %127 = vmatpush1.bf16.msra.mxu0 0
    %128 = vmatprep.subr.bf16.mxu0 0
    %129 = vmatpush1.bf16.msra.mxu0 0
    %130 = vmatprep.subr.bf16.mxu0 0
    %131 = vmatpush1.bf16.msra.mxu0 0
    %132 = vmatprep.subr.bf16.mxu0 0
    %133 = vmatpush1.bf16.msra.mxu0 0
    %134 = vmatprep.subr.bf16.mxu0 0
    %135 = vmatpush1.bf16.msra.mxu0 0
    %136 = vmatprep.subr.bf16.mxu0 0
    %137 = vmatpush1.bf16.msra.mxu0 0
    %138 = vmatprep.subr.bf16.mxu0 0
    %139 = vmatpush1.bf16.msra.mxu0 0
    %140 = vmatprep.subr.bf16.mxu0 0
    %141 = vmatpush1.bf16.msra.mxu0 0
    %142 = vmatprep.subr.bf16.mxu0 0
    %143 = vmatpush1.bf16.msra.mxu0 0
    %144 = vmatprep.subr.bf16.mxu0 0
    %145 = vmatpush1.bf16.msra.mxu0 0
    %146 = vmatprep.subr.bf16.mxu0 0
    %147 = vmatpush1.bf16.msra.mxu0 0
    %148 = vmatprep.subr.bf16.mxu0 0
    %149 = vmatpush1.bf16.msra.mxu0 0
    %150 = vmatprep.mubr.bf16.mxu0 0
    %151 = vmatmul.mubr.bf16.gmra.mrb[0].mxu0 %v116
    %v152 = vpop.f32.mrb[0].mxu0
    %v153 = vadd.f32 %v101, %v152
    %v154 = vpop.f32.mrb[0].mxu0
    %v155 = vpop.f32.mrb[0].mxu0
    %v156 = vpop.f32.mrb[0].mxu0
    %157 = vdwg.mxu0
    %v158 = vmax.f32 %v153, 0.0
    %v159 = vpack.c.bf16 %v158, %v158
    %v160 = vld [vmem:[#allocation7] sm:$0xf]
    %v161 = vld [vmem:[#allocation7 + $0x4] sm:$0xf]
    %v162 = vld [vmem:[#allocation7 + $0x8] sm:$0xf]
    %v163 = vld [vmem:[#allocation7 + $0xc] sm:$0xf]
    %v164 = vld [vmem:[#allocation7 + $0x10] sm:$0xf]
    %v165 = vld [vmem:[#allocation7 + $0x14] sm:$0xf]
    %v166 = vld [vmem:[#allocation7 + $0x18] sm:$0xf]
    %v167 = vld [vmem:[#allocation7 + $0x1c] sm:$0xf]
    %v168 = vld [vmem:[#allocation7 + $0x20] sm:$0xf]
    %v169 = vld [vmem:[#allocation7 + $0x24] sm:$0xf]
    %v170 = vld [vmem:[#allocation7 + $0x28] sm:$0xf]
    %v171 = vld [vmem:[#allocation7 + $0x2c] sm:$0xf]
    %v172 = vld [vmem:[#allocation7 + $0x30] sm:$0xf]
    %v173 = vld [vmem:[#allocation7 + $0x34] sm:$0xf]
    %v174 = vld [vmem:[#allocation7 + $0x38] sm:$0xf]
    %v175 = vld [vmem:[#allocation7 + $0x3c] sm:$0xf]
    %v176 = vld [vmem:[%s5 + $0x1] sm:$0x1]
    %v177 = vlaneseq
    %v178 = vshrl.u32 %v177, 7
    %v179 = vsub.s32 0, %v178
    %v180 = vrot.slane %v176, %v179
    %v197 = vunpack.c.l.b16 %v160
    %v198 = vunpack.c.l.b16 %v161
    %v199 = vunpack.c.l.b16 %v162
    %v200 = vunpack.c.l.b16 %v163
    %v201 = vunpack.c.l.b16 %v164
    %v202 = vunpack.c.l.b16 %v165
    %v203 = vunpack.c.l.b16 %v166
    %v204 = vunpack.c.l.b16 %v167
    %v205 = vunpack.c.l.b16 %v168
    %v206 = vunpack.c.l.b16 %v169
    %v207 = vunpack.c.l.b16 %v170
    %v208 = vunpack.c.l.b16 %v171
    %v209 = vunpack.c.l.b16 %v172
    %v210 = vunpack.c.l.b16 %v173
    %v211 = vunpack.c.l.b16 %v174
    %v212 = vunpack.c.l.b16 %v175
    %v213 = vpack.c.b16 %v198, %v197
    %v214 = vpack.c.b16 %v200, %v199
    %v215 = vpack.c.b16 %v202, %v201
    %v216 = vpack.c.b16 %v204, %v203
    %v217 = vpack.c.b16 %v206, %v205
    %v218 = vpack.c.b16 %v208, %v207
    %v219 = vpack.c.b16 %v210, %v209
    %v220 = vpack.c.b16 %v212, %v211
    %229 = vmatprep.subr.bf16.mxu0 0
    %230 = vmatpush1.bf16.msra.mxu0 %v213
    %231 = vmatprep.subr.bf16.mxu0 0
    %232 = vmatpush1.bf16.msra.mxu0 %v214
    %233 = vmatprep.subr.bf16.mxu0 0
    %234 = vmatpush1.bf16.msra.mxu0 %v215
    %235 = vmatprep.subr.bf16.mxu0 0
    %236 = vmatpush1.bf16.msra.mxu0 %v216
    %237 = vmatprep.subr.bf16.mxu0 0
    %238 = vmatpush1.bf16.msra.mxu0 %v217
    %239 = vmatprep.subr.bf16.mxu0 0
    %240 = vmatpush1.bf16.msra.mxu0 %v218
    %241 = vmatprep.subr.bf16.mxu0 0
    %242 = vmatpush1.bf16.msra.mxu0 %v219
    %243 = vmatprep.subr.bf16.mxu0 0
    %244 = vmatpush1.bf16.msra.mxu0 %v220
    %245 = vmatprep.subr.bf16.mxu0 0
    %246 = vmatpush1.bf16.msra.mxu0 0
    %247 = vmatprep.subr.bf16.mxu0 0
    %248 = vmatpush1.bf16.msra.mxu0 0
    %249 = vmatprep.subr.bf16.mxu0 0
    %250 = vmatpush1.bf16.msra.mxu0 0
    %251 = vmatprep.subr.bf16.mxu0 0
    %252 = vmatpush1.bf16.msra.mxu0 0
    %253 = vmatprep.subr.bf16.mxu0 0
    %254 = vmatpush1.bf16.msra.mxu0 0
    %255 = vmatprep.subr.bf16.mxu0 0
    %256 = vmatpush1.bf16.msra.mxu0 0
    %257 = vmatprep.subr.bf16.mxu0 0
    %258 = vmatpush1.bf16.msra.mxu0 0
    %259 = vmatprep.subr.bf16.mxu0 0
    %260 = vmatpush1.bf16.msra.mxu0 0
    %261 = vmatprep.mubr.bf16.mxu0 0
    %262 = vmatmul.mubr.bf16.gmra.mrb[0].mxu0 %v159
    %v263 = vpop.f32.mrb[0].mxu0
    %v264 = vadd.f32 %v180, %v263
    %v265 = vpop.f32.mrb[0].mxu0
    %v266 = vpop.f32.mrb[0].mxu0
    %v267 = vpop.f32.mrb[0].mxu0
    %268 = vdwg.mxu0
    %v269 = vmax.f32 %v264, 0.0
    %v270 = vpack.c.bf16 %v269, %v269
    %v271 = vld [vmem:[#allocation8] sm:$0xf]
    %v272 = vld [vmem:[#allocation8 + $0x4] sm:$0xf]
    %v273 = vld [vmem:[#allocation8 + $0x8] sm:$0xf]
    %v274 = vld [vmem:[#allocation8 + $0xc] sm:$0xf]
    %v275 = vld [vmem:[#allocation8 + $0x10] sm:$0xf]
    %v276 = vld [vmem:[#allocation8 + $0x14] sm:$0xf]
    %v277 = vld [vmem:[#allocation8 + $0x18] sm:$0xf]
    %v278 = vld [vmem:[#allocation8 + $0x1c] sm:$0xf]
    %v279 = vld [vmem:[#allocation8 + $0x20] sm:$0xf]
    %v280 = vld [vmem:[#allocation8 + $0x24] sm:$0xf]
    %v281 = vld [vmem:[#allocation8 + $0x28] sm:$0xf]
    %v282 = vld [vmem:[#allocation8 + $0x2c] sm:$0xf]
    %v283 = vld [vmem:[#allocation8 + $0x30] sm:$0xf]
    %v284 = vld [vmem:[#allocation8 + $0x34] sm:$0xf]
    %v285 = vld [vmem:[#allocation8 + $0x38] sm:$0xf]
    %v286 = vld [vmem:[#allocation8 + $0x3c] sm:$0xf]
    %v287 = vld [vmem:[%s5 + $0x2] sm:$0x1]
    %v288 = vlaneseq
    %v289 = vshrl.u32 %v288, 7
    %v290 = vsub.s32 0, %v289
    %v291 = vrot.slane %v287, %v290
    %v308 = vunpack.c.l.b16 %v271
    %v309 = vunpack.c.l.b16 %v272
    %v310 = vunpack.c.l.b16 %v273
    %v311 = vunpack.c.l.b16 %v274
    %v312 = vunpack.c.l.b16 %v275
    %v313 = vunpack.c.l.b16 %v276
    %v314 = vunpack.c.l.b16 %v277
    %v315 = vunpack.c.l.b16 %v278
    %v316 = vunpack.c.l.b16 %v279
    %v317 = vunpack.c.l.b16 %v280
    %v318 = vunpack.c.l.b16 %v281
    %v319 = vunpack.c.l.b16 %v282
    %v320 = vunpack.c.l.b16 %v283
    %v321 = vunpack.c.l.b16 %v284
    %v322 = vunpack.c.l.b16 %v285
    %v323 = vunpack.c.l.b16 %v286
    %v324 = vpack.c.b16 %v309, %v308
    %v325 = vpack.c.b16 %v311, %v310
    %v326 = vpack.c.b16 %v313, %v312
    %v327 = vpack.c.b16 %v315, %v314
    %v328 = vpack.c.b16 %v317, %v316
    %v329 = vpack.c.b16 %v319, %v318
    %v330 = vpack.c.b16 %v321, %v320
    %v331 = vpack.c.b16 %v323, %v322
    %340 = vmatprep.subr.bf16.mxu0 0
    %341 = vmatpush1.bf16.msra.mxu0 %v324
    %342 = vmatprep.subr.bf16.mxu0 0
    %343 = vmatpush1.bf16.msra.mxu0 %v325
    %344 = vmatprep.subr.bf16.mxu0 0
    %345 = vmatpush1.bf16.msra.mxu0 %v326
    %346 = vmatprep.subr.bf16.mxu0 0
    %347 = vmatpush1.bf16.msra.mxu0 %v327
    %348 = vmatprep.subr.bf16.mxu0 0
    %349 = vmatpush1.bf16.msra.mxu0 %v328
    %350 = vmatprep.subr.bf16.mxu0 0
    %351 = vmatpush1.bf16.msra.mxu0 %v329
    %352 = vmatprep.subr.bf16.mxu0 0
    %353 = vmatpush1.bf16.msra.mxu0 %v330
    %354 = vmatprep.subr.bf16.mxu0 0
    %355 = vmatpush1.bf16.msra.mxu0 %v331
    %356 = vmatprep.subr.bf16.mxu0 0
    %357 = vmatpush1.bf16.msra.mxu0 0
    %358 = vmatprep.subr.bf16.mxu0 0
    %359 = vmatpush1.bf16.msra.mxu0 0
    %360 = vmatprep.subr.bf16.mxu0 0
    %361 = vmatpush1.bf16.msra.mxu0 0
    %362 = vmatprep.subr.bf16.mxu0 0
    %363 = vmatpush1.bf16.msra.mxu0 0
    %364 = vmatprep.subr.bf16.mxu0 0
    %365 = vmatpush1.bf16.msra.mxu0 0
    %366 = vmatprep.subr.bf16.mxu0 0
    %367 = vmatpush1.bf16.msra.mxu0 0
    %368 = vmatprep.subr.bf16.mxu0 0
    %369 = vmatpush1.bf16.msra.mxu0 0
    %370 = vmatprep.subr.bf16.mxu0 0
    %371 = vmatpush1.bf16.msra.mxu0 0
    %372 = vmatprep.mubr.bf16.mxu0 0
    %373 = vmatmul.mubr.bf16.gmra.mrb[0].mxu0 %v270
    %v374 = vpop.f32.mrb[0].mxu0
    %v375 = vadd.f32 %v291, %v374
    %v376 = vpop.f32.mrb[0].mxu0
    %v377 = vpop.f32.mrb[0].mxu0
    %v378 = vpop.f32.mrb[0].mxu0
    %379 = vdwg.mxu0
    %v380 = vmax.f32 %v375, 0.0
    %v381 = vpack.c.bf16 %v380, %v380
    %v382 = vld [vmem:[#allocation10] sm:$0xf]
    %v383 = vld [vmem:[#allocation10 + $0x4] sm:$0xf]
    %v384 = vld [vmem:[#allocation10 + $0x8] sm:$0xf]
    %v385 = vld [vmem:[#allocation10 + $0xc] sm:$0xf]
    %v386 = vld [vmem:[#allocation10 + $0x10] sm:$0xf]
    %v387 = vld [vmem:[#allocation10 + $0x14] sm:$0xf]
    %v388 = vld [vmem:[#allocation10 + $0x18] sm:$0xf]
    %v389 = vld [vmem:[#allocation10 + $0x1c] sm:$0xf]
    %v390 = vld [vmem:[#allocation10 + $0x20] sm:$0xf]
    %v391 = vld [vmem:[#allocation10 + $0x24] sm:$0xf]
    %v392 = vld [vmem:[#allocation10 + $0x28] sm:$0xf]
    %v393 = vld [vmem:[#allocation10 + $0x2c] sm:$0xf]
    %v394 = vld [vmem:[#allocation10 + $0x30] sm:$0xf]
    %v395 = vld [vmem:[#allocation10 + $0x34] sm:$0xf]
    %v396 = vld [vmem:[#allocation10 + $0x38] sm:$0xf]
    %v397 = vld [vmem:[#allocation10 + $0x3c] sm:$0xf]
    %v398 = vld [vmem:[%s5 + $0x3] sm:$0x1]
    %v399 = vlaneseq
    %v400 = vshrl.u32 %v399, 7
    %v401 = vsub.s32 0, %v400
    %v402 = vrot.slane %v398, %v401
    %v419 = vunpack.c.l.b16 %v382
    %v420 = vunpack.c.l.b16 %v383
    %v421 = vunpack.c.l.b16 %v384
    %v422 = vunpack.c.l.b16 %v385
    %v423 = vunpack.c.l.b16 %v386
    %v424 = vunpack.c.l.b16 %v387
    %v425 = vunpack.c.l.b16 %v388
    %v426 = vunpack.c.l.b16 %v389
    %v427 = vunpack.c.l.b16 %v390
    %v428 = vunpack.c.l.b16 %v391
    %v429 = vunpack.c.l.b16 %v392
    %v430 = vunpack.c.l.b16 %v393
    %v431 = vunpack.c.l.b16 %v394
    %v432 = vunpack.c.l.b16 %v395
    %v433 = vunpack.c.l.b16 %v396
    %v434 = vunpack.c.l.b16 %v397
    %v435 = vpack.c.b16 %v420, %v419
    %v436 = vpack.c.b16 %v422, %v421
    %v437 = vpack.c.b16 %v424, %v423
    %v438 = vpack.c.b16 %v426, %v425
    %v439 = vpack.c.b16 %v428, %v427
    %v440 = vpack.c.b16 %v430, %v429
    %v441 = vpack.c.b16 %v432, %v431
    %v442 = vpack.c.b16 %v434, %v433
    %451 = vmatprep.subr.bf16.mxu0 0
    %452 = vmatpush1.bf16.msra.mxu0 %v435
    %453 = vmatprep.subr.bf16.mxu0 0
    %454 = vmatpush1.bf16.msra.mxu0 %v436
    %455 = vmatprep.subr.bf16.mxu0 0
    %456 = vmatpush1.bf16.msra.mxu0 %v437
    %457 = vmatprep.subr.bf16.mxu0 0
    %458 = vmatpush1.bf16.msra.mxu0 %v438
    %459 = vmatprep.subr.bf16.mxu0 0
    %460 = vmatpush1.bf16.msra.mxu0 %v439
    %461 = vmatprep.subr.bf16.mxu0 0
    %462 = vmatpush1.bf16.msra.mxu0 %v440
    %463 = vmatprep.subr.bf16.mxu0 0
    %464 = vmatpush1.bf16.msra.mxu0 %v441
    %465 = vmatprep.subr.bf16.mxu0 0
    %466 = vmatpush1.bf16.msra.mxu0 %v442
    %467 = vmatprep.subr.bf16.mxu0 0
    %468 = vmatpush1.bf16.msra.mxu0 0
    %469 = vmatprep.subr.bf16.mxu0 0
    %470 = vmatpush1.bf16.msra.mxu0 0
    %471 = vmatprep.subr.bf16.mxu0 0
    %472 = vmatpush1.bf16.msra.mxu0 0
    %473 = vmatprep.subr.bf16.mxu0 0
    %474 = vmatpush1.bf16.msra.mxu0 0
    %475 = vmatprep.subr.bf16.mxu0 0
    %476 = vmatpush1.bf16.msra.mxu0 0
    %477 = vmatprep.subr.bf16.mxu0 0
    %478 = vmatpush1.bf16.msra.mxu0 0
    %479 = vmatprep.subr.bf16.mxu0 0
    %480 = vmatpush1.bf16.msra.mxu0 0
    %481 = vmatprep.subr.bf16.mxu0 0
    %482 = vmatpush1.bf16.msra.mxu0 0
    %483 = vmatprep.mubr.bf16.mxu0 0
    %484 = vmatmul.mubr.bf16.gmra.mrb[0].mxu0 %v381
    %v485 = vpop.f32.mrb[0].mxu0
    %v486 = vadd.f32 %v402, %v485
    %v487 = vpop.f32.mrb[0].mxu0
    %v488 = vpop.f32.mrb[0].mxu0
    %v489 = vpop.f32.mrb[0].mxu0
    %490 = vdwg.mxu0
    %491 = vst [vmem:[#allocation11] sm:$0xff] %v486
    // Predicated region
    $region46: #{tpu_custom_call.1} parent=1 // pred_check
      _
    $region47: #{tpu_custom_call.1} parent=1 // pred_check_branch
      %493 = sbr.rel (0) target = $region49
    $region48: #{tpu_custom_call.1} parent=1 // pred_region
      %s495 = ssub.s32 128, 128
      %496 = vsyncadd [#allocation4], %s495
      %s498 = sshll.u32 [#allocation11], 4
      %s499 = int_to_ptr.vmem [resolvable:$true] %s498
      %501 = dma.vmem_to_hbm [thread:$0]  %s499, 128, %s6, [#allocation4]
    $region49: #{tpu_custom_call.1} parent=1 // pred_fallthru
      _
    // Predicated region
    $region50: #{tpu_custom_call.1} parent=1 // pred_check
      _
    $region51: #{tpu_custom_call.1} parent=1 // pred_check_branch
      %503 = sbr.rel (0) target = $region53
    $region52: #{tpu_custom_call.1} parent=1 // pred_region
      %504 = dma.done [#allocation4], 128
    $region53: #{tpu_custom_call.1} parent=1 // pred_fallthru
      _
    %505 = vsyncpa [#allocation3], 1
    %506 = vsyncpa [#allocation6], 1
    %507 = vsyncpa [#allocation9], 1
    %508 = vsyncpa [#allocation4], 1

</llo_original>
